<compile_context>
chip_gen: v7x
topology: tpu7x:2x2x1
jax: 0.10.0
libtpu: 0.0.40
codegen_flags: <defaults>
</compile_context>

<pallas_src>
import functools

import jax
import jax.numpy as jnp
from jax import lax
from jax.experimental import pallas as pl
from jax.experimental.pallas import tpu as pltpu


def _round_up(x, m):
    return ((x + m - 1) // m) * m


# ----------------------------------------------------------------------------
# matmul + bias, tiled over M
# ----------------------------------------------------------------------------
def _mm_bias_kernel(a_ref, w_ref, b_ref, o_ref, *, relu):
    a = a_ref[...].astype(jnp.bfloat16)
    w = w_ref[...].astype(jnp.bfloat16)
    y = jnp.dot(a, w, preferred_element_type=jnp.float32) + b_ref[...]
    if relu:
        y = jnp.maximum(y, 0.0)
    o_ref[...] = y.astype(o_ref.dtype)


def matmul_bias(a, w, b, relu=False, out_dtype=jnp.float32, tile_m=256):
    M, K = a.shape
    K2, N = w.shape
    assert K == K2
    tm = min(tile_m, _round_up(M, 8))
    Mp = _round_up(M, tm)
    a_p = jnp.pad(a, ((0, Mp - M), (0, 0))) if Mp != M else a
    out = pl.pallas_call(
        functools.partial(_mm_bias_kernel, relu=relu),
        grid=(Mp // tm,),
        in_specs=[
            pl.BlockSpec((tm, K), lambda i: (i, 0)),
            pl.BlockSpec((K, N), lambda i: (0, 0)),
            pl.BlockSpec((1, N), lambda i: (0, 0)),
        ],
        out_specs=pl.BlockSpec((tm, N), lambda i: (i, 0)),
        out_shape=jax.ShapeDtypeStruct((Mp, N), out_dtype),
        compiler_params=pltpu.CompilerParams(dimension_semantics=("parallel",)),
    )(a_p, w, b.reshape(1, N))
    return out[:M] if Mp != M else out


# ----------------------------------------------------------------------------
# PAM: parallax attention over batched epipolar rows
# ----------------------------------------------------------------------------
def _softmax_last(x):
    m = jnp.max(x, axis=-1, keepdims=True)
    e = jnp.exp(x - m)
    return e * pl.reciprocal(jnp.sum(e, axis=-1, keepdims=True), approx=True)


def _pam_attend(q_ref, s_ref, rv_ref):
    q = q_ref[...].astype(jnp.bfloat16)
    s = s_ref[...].astype(jnp.bfloat16)
    rv = rv_ref[...].astype(jnp.bfloat16)
    # Two matmuls instead of a 3-D transpose of the score tensor.
    score_rl = jnp.einsum('twc,tvc->twv', q, s,
                          preferred_element_type=jnp.float32)
    score_lr = jnp.einsum('twc,tvc->twv', s, q,
                          preferred_element_type=jnp.float32)
    m_rl = _softmax_last(score_rl)
    m_lr = _softmax_last(score_lr)
    wrap = jnp.einsum('twv,tvc->twc', m_rl.astype(jnp.bfloat16), rv,
                      preferred_element_type=jnp.float32)
    return m_rl, m_lr, wrap


def _pam_infer_kernel(q_ref, s_ref, rv_ref, wrap_ref):
    _, _, wrap = _pam_attend(q_ref, s_ref, rv_ref)
    wrap_ref[...] = wrap


def _pam_train_kernel(q_ref, s_ref, rv_ref,
                      wrap_ref, mrl_ref, mlr_ref, mlrl_ref, mrlr_ref, v_ref):
    m_rl, m_lr, wrap = _pam_attend(q_ref, s_ref, rv_ref)
    wrap_ref[...] = wrap
    mrl_ref[...] = m_rl
    mlr_ref[...] = m_lr
    mlrl_ref[...] = jnp.einsum('twv,tvu->twu',
                               m_rl.astype(jnp.bfloat16),
                               m_lr.astype(jnp.bfloat16),
                               preferred_element_type=jnp.float32)
    mrlr_ref[...] = jnp.einsum('twv,tvu->twu',
                               m_lr.astype(jnp.bfloat16),
                               m_rl.astype(jnp.bfloat16),
                               preferred_element_type=jnp.float32)
    # TODO(synk): original PAM thresholds cycle-attention into a binary
    # validity mask; here V is the raw attention-column occupancy.
    vl = jnp.sum(m_lr, axis=1, keepdims=True)   # (T, 1, W)
    vr = jnp.sum(m_rl, axis=1, keepdims=True)   # (T, 1, W)
    v_ref[...] = jnp.concatenate([vl, vr], axis=-1)   # (T, 1, 2W) lane-dense


def pam_attention(q, s, rv, training=True, tile_bh=8):
    BH, W, C = q.shape
    t = min(tile_bh, BH)
    while BH % t:
        t -= 1
    spec_wc = pl.BlockSpec((t, W, C), lambda i: (i, 0, 0))
    spec_ww = pl.BlockSpec((t, W, W), lambda i: (i, 0, 0))
    spec_v = pl.BlockSpec((t, 1, 2 * W), lambda i: (i, 0, 0))
    if training:
        kern = _pam_train_kernel
        out_specs = [spec_wc, spec_ww, spec_ww, spec_ww, spec_ww, spec_v]
        out_shape = [
            jax.ShapeDtypeStruct((BH, W, C), jnp.float32),      # wrap
            jax.ShapeDtypeStruct((BH, W, W), jnp.float32),      # M_right_to_left
            jax.ShapeDtypeStruct((BH, W, W), jnp.float32),      # M_left_to_right
            jax.ShapeDtypeStruct((BH, W, W), jnp.float32),      # M_left_right_left
            jax.ShapeDtypeStruct((BH, W, W), jnp.float32),      # M_right_left_right
            jax.ShapeDtypeStruct((BH, 1, 2 * W), jnp.float32),  # packed V
        ]
    else:
        kern = _pam_infer_kernel
        out_specs = [spec_wc]
        out_shape = [jax.ShapeDtypeStruct((BH, W, C), jnp.float32)]
    return pl.pallas_call(
        kern,
        grid=(BH // t,),
        in_specs=[spec_wc, spec_wc, spec_wc],
        out_specs=out_specs,
        out_shape=out_shape,
        compiler_params=pltpu.CompilerParams(dimension_semantics=("parallel",)),
    )(q, s, rv)


# ----------------------------------------------------------------------------
# Fused superpixel clustering (init + iterations + final assignments)
# ----------------------------------------------------------------------------
_TN = (((0,), (0,)), ((), ()))   # contract leading (pixel) axis of both
_NT = (((1,), (1,)), ((), ()))   # contract trailing (feature) axis of both


def _cluster_kernel(tf_ref, p2sp_ref, inv_ref, init_ref, assoc_ref,
                    *, num_iter, feat_dim):
    tf_aug = tf_ref[0]            # (N, Ct+1); last column is all-ones
    p2sp = p2sp_ref[0]            # (N, 9) int32
    invis = inv_ref[0]            # (N, 9) int32
    init = init_ref[0]            # (N, 1) int32
    N = tf_aug.shape[0]
    Kp = assoc_ref.shape[-1]
    Ct = feat_dim

    iota_k = lax.broadcasted_iota(jnp.int32, (N, Kp), 1)

    # 9-neighbour validity mask rebuilt in VMEM from the small index tables.
    mask = jnp.zeros((N, Kp), jnp.float32)
    for j in range(9):
        nb = p2sp[:, j:j + 1]
        ok = (invis[:, j:j + 1] == 0)
        mask = jnp.maximum(mask, ((iota_k == nb) & ok).astype(jnp.float32))

    def sp_from_weights(w):
        # w: (N, Kp) -> superpixel features (Kp, Ct); the appended ones column
        # of tf_aug yields the normalising counts inside the same MXU pass.
        agg = lax.dot_general(w, tf_aug, _TN, preferred_element_type=jnp.float32)
        inv_cnt = pl.reciprocal(agg[:, Ct:Ct + 1] + 1e-8, approx=True)
        return agg[:, :Ct] * inv_cnt

    def assoc_from_sp(sp):
        # softmax_k( -||p - s_k||^2 ) == softmax_k( 2 p.s_k - ||s_k||^2 )
        sp_aug = jnp.concatenate(
            [2.0 * sp, -jnp.sum(sp * sp, axis=-1, keepdims=True)], axis=-1)
        logits = lax.dot_general(tf_aug, sp_aug, _NT,
                                 preferred_element_type=jnp.float32)  # (N, Kp)
        neg = jnp.where(mask > 0.0, logits, -1e30)
        m = jnp.max(neg, axis=-1, keepdims=True)
        e = jnp.exp(neg - m) * mask
        return e * pl.reciprocal(jnp.sum(e, axis=-1, keepdims=True) + 1e-12,
                                 approx=True)

    # Hard init from init_index (segment-mean), then soft iterations.
    onehot = (init == iota_k).astype(jnp.float32)
    sp = sp_from_weights(onehot)

    def body(_, sp_c):
        return sp_from_weights(assoc_from_sp(sp_c))

    sp = lax.fori_loop(0, num_iter, body, sp)
    assoc_ref[0] = assoc_from_sp(sp)


def cluster_assoc(tf_aug, p2sp, invis, init_idx, num_spixels_padded, num_iter):
    # TODO(synk): for large H*W tile the N axis (grid=(B, N//TILE_N)) with a
    # cross-tile accumulation of the superpixel sums to fit v7x's 64 MiB VMEM.
    B, N, Ct1 = tf_aug.shape
    Kp = num_spixels_padded
    return pl.pallas_call(
        functools.partial(_cluster_kernel, num_iter=num_iter, feat_dim=Ct1 - 1),
        grid=(B,),
        in_specs=[
            pl.BlockSpec((1, N, Ct1), lambda b: (b, 0, 0)),
            pl.BlockSpec((1, N, 9), lambda b: (b, 0, 0)),
            pl.BlockSpec((1, N, 9), lambda b: (b, 0, 0)),
            pl.BlockSpec((1, N, 1), lambda b: (b, 0, 0)),
        ],
        out_specs=pl.BlockSpec((1, N, Kp), lambda b: (b, 0, 0)),
        out_shape=jax.ShapeDtypeStruct((B, N, Kp), jnp.float32),
        compiler_params=pltpu.CompilerParams(dimension_semantics=("parallel",)),
    )(tf_aug, p2sp, invis, init_idx)


# ----------------------------------------------------------------------------
# Fused finalize: SpixelFeature2 (img + labels) + decode, one read of assoc
# ----------------------------------------------------------------------------
def _finalize_kernel(assoc_ref, img_ref, lab_ref,
                     spimg_ref, splab_ref, recon_ref, *, img_dim):
    a = assoc_ref[0]          # (N, Kp)
    img_aug = img_ref[0]      # (N, Ci+1); last column is all-ones
    lab = lab_ref[0]          # (N, Cp)
    Ci = img_dim
    agg = lax.dot_general(a, img_aug, _TN, preferred_element_type=jnp.float32)
    inv_cnt = pl.reciprocal(agg[:, Ci:Ci + 1] + 1e-8, approx=True)   # (Kp, 1)
    sp_img = agg[:, :Ci] * inv_cnt
    sp_lab = lax.dot_general(a, lab, _TN,
                             preferred_element_type=jnp.float32) * inv_cnt
    spimg_ref[0] = sp_img
    splab_ref[0] = sp_lab
    recon_ref[0] = jnp.dot(a, sp_lab, preferred_element_type=jnp.float32)


def finalize(assoc, img_aug, lab):
    B, N, Kp = assoc.shape
    Ci = img_aug.shape[-1] - 1
    Cp = lab.shape[-1]
    return pl.pallas_call(
        functools.partial(_finalize_kernel, img_dim=Ci),
        grid=(B,),
        in_specs=[
            pl.BlockSpec((1, N, Kp), lambda b: (b, 0, 0)),
            pl.BlockSpec((1, N, Ci + 1), lambda b: (b, 0, 0)),
            pl.BlockSpec((1, N, Cp), lambda b: (b, 0, 0)),
        ],
        out_specs=[
            pl.BlockSpec((1, Kp, Ci), lambda b: (b, 0, 0)),
            pl.BlockSpec((1, Kp, Cp), lambda b: (b, 0, 0)),
            pl.BlockSpec((1, N, Cp), lambda b: (b, 0, 0)),
        ],
        out_shape=[
            jax.ShapeDtypeStruct((B, Kp, Ci), jnp.float32),
            jax.ShapeDtypeStruct((B, Kp, Cp), jnp.float32),
            jax.ShapeDtypeStruct((B, N, Cp), jnp.float32),
        ],
        compiler_params=pltpu.CompilerParams(dimension_semantics=("parallel",)),
    )(assoc, img_aug, lab)


# ----------------------------------------------------------------------------
# Plain JAX glue
# ----------------------------------------------------------------------------
def conv3x3(x_nhwc, w, b, relu=True):
    # TODO(synk): replace with a halo-tiled Pallas conv kernel; XLA's TPU conv
    # (bf16 operands, f32 accumulation) avoids the 9x im2col HBM blowup.
    y = lax.conv_general_dilated(
        x_nhwc.astype(jnp.bfloat16), w.astype(jnp.bfloat16),
        window_strides=(1, 1), padding='SAME',
        dimension_numbers=('NHWC', 'HWIO', 'NHWC'),
        preferred_element_type=jnp.float32)
    y = y + b
    return jnp.maximum(y, 0.0) if relu else y


def to_flat_nhwc(x_nchw):
    B, C, H, W = x_nchw.shape
    return jnp.transpose(x_nchw, (0, 2, 3, 1)).reshape(B, H * W, C)


def to_nchw(x_flat, B, H, W):
    C = x_flat.shape[-1]
    return jnp.transpose(x_flat.reshape(B, H, W, C), (0, 3, 1, 2))


# ----------------------------------------------------------------------------
# Model
# ----------------------------------------------------------------------------
class StereoSpixelNetPallas:
    def __init__(self, num_iter=2, is_training=True, stereo=True,
                 feat_ch=64, pos_ch=15, seed=0):
        self.num_iter = num_iter
        self.is_training = is_training
        self.stereo = stereo
        self.feat_ch = feat_ch
        self.pos_ch = pos_ch

        key = jax.random.PRNGKey(seed)
        ks = jax.random.split(key, 8)
        sc = 0.05
        # feature_network: two 3x3 convs (3->32->feat_ch), ReLU.
        # TODO(synk): exact feature_network architecture not in provided source.
        self.w1 = sc * jax.random.normal(ks[0], (3, 3, 3, 32), jnp.float32)
        self.b1 = jnp.zeros((32,), jnp.float32)
        self.w2 = sc * jax.random.normal(ks[1], (3, 3, 32, feat_ch), jnp.float32)
        self.b2 = jnp.zeros((feat_ch,), jnp.float32)
        # PAM(64): 1x1 query/key projections + fusion head.
        self.wq = sc * jax.random.normal(ks[2], (feat_ch, feat_ch), jnp.float32)
        self.bq = jnp.zeros((feat_ch,), jnp.float32)
        self.wk = sc * jax.random.normal(ks[3], (feat_ch, feat_ch), jnp.float32)
        self.bk = jnp.zeros((feat_ch,), jnp.float32)
        # TODO(synk): exact PAM fusion conv (uses validity mask) not provided;
        # approximated by 1x1 conv on concat(left, warped) + residual.
        self.wf = sc * jax.random.normal(ks[4], (2 * feat_ch, feat_ch), jnp.float32)
        self.bf = jnp.zeros((feat_ch,), jnp.float32)
        # position_encoding head: 1x1 conv feat_ch -> pos_ch, ReLU.
        # TODO(synk): exact position_encoding definition not provided.
        self.wp = sc * jax.random.normal(ks[5], (feat_ch, pos_ch), jnp.float32)
        self.bp = jnp.zeros((pos_ch,), jnp.float32)

    def _feature_extractor(self, x_nhwc):
        B, H, W, _ = x_nhwc.shape
        h1 = conv3x3(x_nhwc, self.w1, self.b1, relu=True)
        h2 = conv3x3(h1, self.w2, self.b2, relu=True)
        return h2.reshape(B, H * W, self.feat_ch)

    def forward(self, l, r, left_img, right_img, p2sp_index, invisible,
                init_index, cir_index, problabel, spixel_h, spixel_w,
                device=None):
        num_sph = int(spixel_h[0])
        num_spw = int(spixel_w[0])
        K = num_sph * num_spw
        Kp = _round_up(K, 128)          # lane-dense superpixel axis
        B, _, H, W = left_img.shape
        N = H * W
        Cf = self.feat_ch

        # left_img / right_img = [xy(2ch), color(3ch)]; strip xy for the CNN.
        left = jnp.transpose(left_img[:, 2:, :, :], (0, 2, 3, 1))
        right = jnp.transpose(right_img[:, 2:, :, :], (0, 2, 3, 1))

        left_feature = self._feature_extractor(left)        # (B, N, Cf)
        right_feature = self._feature_extractor(right)

        # ------------------ PAM: parallax attention along rows ---------------
        q = matmul_bias(left_feature.reshape(-1, Cf), self.wq, self.bq,
                        out_dtype=jnp.bfloat16).reshape(B * H, W, Cf)
        s = matmul_bias(right_feature.reshape(-1, Cf), self.wk, self.bk,
                        out_dtype=jnp.bfloat16).reshape(B * H, W, Cf)
        rv = right_feature.reshape(B * H, W, Cf).astype(jnp.bfloat16)

        pam_out = pam_attention(q, s, rv, training=self.is_training)
        if self.is_training:
            wrap, m_rl, m_lr, m_lrl, m_rlr, v = pam_out
        else:
            (wrap,) = pam_out

        wrap_flat = wrap.reshape(B, N, Cf)
        cat = jnp.concatenate([left_feature, wrap_flat], axis=-1).reshape(-1, 2 * Cf)
        fused = matmul_bias(cat, self.wf, self.bf, relu=True).reshape(B, N, Cf)
        stereo_feature = fused + left_feature

        # ------------------ position encoding + trans features ---------------
        pos_feature = matmul_bias(stereo_feature.reshape(-1, Cf),
                                  self.wp, self.bp, relu=True)
        pos_feature = pos_feature.reshape(B, N, self.pos_ch)
        left_img_flat = to_flat_nhwc(left_img)               # (B, N, 5)
        trans_features = jnp.concatenate([pos_feature, left_img_flat], axis=-1)
        ones_col = jnp.ones((B, N, 1), jnp.float32)
        tf_aug = jnp.concatenate([trans_features, ones_col], axis=-1)

        # ------------------ fused clustering (init + iters + final assoc) ----
        # TODO(synk): cir_index drives the original sparse 9-neighbour scatter;
        # the in-kernel dense (masked) aggregation is equivalent, so it's unused.
        assoc = cluster_assoc(tf_aug,
                              p2sp_index.astype(jnp.int32),
                              invisible.astype(jnp.int32),
                              init_index.astype(jnp.int32)[..., None],
                              Kp, self.num_iter)              # (B, N, Kp)

        # ------------------ fused SpixelFeature2 (img + labels) + decode -----
        img_aug = jnp.concatenate([left_img_flat, ones_col], axis=-1)
        n_classes = problabel.shape[1]
        Cp = _round_up(n_classes, 128)
        problabel_flat = to_flat_nhwc(problabel)
        problabel_pad = jnp.pad(problabel_flat,
                                ((0, 0), (0, 0), (0, Cp - n_classes)))

        new_spixel_feat, _spixel_label, recon_label_p = finalize(
            assoc, img_aug, problabel_pad)

        # Hard reconstruction (Semar) via gather instead of one-hot matmul.
        new_spix_indices = jnp.argmax(assoc[:, :, :K], axis=-1).astype(jnp.int32)
        recon_feat2 = jnp.take_along_axis(new_spixel_feat,
                                          new_spix_indices[..., None], axis=1)

        recon_feat2 = to_nchw(recon_feat2, B, H, W)                       # (B,5,H,W)
        recon_label = to_nchw(recon_label_p[:, :, :n_classes], B, H, W)   # (B,50,H,W)
        new_spix_indices = new_spix_indices.reshape(B, H, W)

        if self.is_training:
            M_right_to_left = m_rl.reshape(B, H, W, W)
            M_left_to_right = m_lr.reshape(B, H, W, W)
            M_left_right_left = m_lrl.reshape(B, H, W, W)
            M_right_left_right = m_rlr.reshape(B, H, W, W)
            v4 = v.reshape(B, H, 2 * W)
            V_left_to_right = v4[:, :, :W][:, None]
            V_right_to_left = v4[:, :, W:][:, None]
            if self.stereo:
                return (recon_feat2, recon_label, new_spix_indices,
                        (M_right_to_left, M_left_to_right),
                        (M_left_right_left, M_right_left_right),
                        (V_left_to_right, V_right_to_left))
            return (recon_feat2, recon_label, new_spix_indices)
        return (recon_feat2, new_spix_indices)


# ----------------------------------------------------------------------------
# Main
# ----------------------------------------------------------------------------
if __name__ == "__main__":
    key = jax.random.PRNGKey(0)
    B, H, W = 2, 16, 16
    num_sph, num_spw = 4, 4
    K = num_sph * num_spw
    n_classes = 50

    k_img_l, k_img_r, k_lab = jax.random.split(key, 3)

    # xy coordinate channels + 3 color channels -> 5-channel "img" tensors.
    ys, xs = jnp.meshgrid(jnp.arange(H, dtype=jnp.float32),
                          jnp.arange(W, dtype=jnp.float32), indexing="ij")
    xy = jnp.stack([ys / H, xs / W], axis=0)                     # (2,H,W)
    xy = jnp.broadcast_to(xy[None], (B, 2, H, W))
    color_l = jax.random.normal(k_img_l, (B, 3, H, W), jnp.float32)
    color_r = jax.random.normal(k_img_r, (B, 3, H, W), jnp.float32)
    left_img = jnp.concatenate([xy, color_l], axis=1)            # (B,5,H,W)
    right_img = jnp.concatenate([xy, color_r], axis=1)

    l = jnp.zeros((B, 3, H, W), jnp.float32)                     # unused in forward
    r = jnp.zeros((B, 3, H, W), jnp.float32)

    problabel = jax.nn.softmax(
        jax.random.normal(k_lab, (B, n_classes, H, W), jnp.float32), axis=1)

    # superpixel index tables
    sp_h, sp_w = H // num_sph, W // num_spw
    yy, xx = jnp.meshgrid(jnp.arange(H), jnp.arange(W), indexing="ij")
    sy, sx = yy // sp_h, xx // sp_w
    init_index_2d = sy * num_spw + sx
    neigh, invis = [], []
    for dy in (-1, 0, 1):
        for dx in (-1, 0, 1):
            ny, nx = sy + dy, sx + dx
            oob = (ny < 0) | (ny >= num_sph) | (nx < 0) | (nx >= num_spw)
            nyc = jnp.clip(ny, 0, num_sph - 1)
            nxc = jnp.clip(nx, 0, num_spw - 1)
            neigh.append((nyc * num_spw + nxc).reshape(-1))
            invis.append(oob.astype(jnp.int32).reshape(-1))
    p2sp_index = jnp.broadcast_to(jnp.stack(neigh, -1)[None], (B, H * W, 9))
    invisible = jnp.broadcast_to(jnp.stack(invis, -1)[None], (B, H * W, 9))
    init_index = jnp.broadcast_to(init_index_2d.reshape(-1)[None], (B, H * W))
    cir_index = jnp.zeros((B, K, 9), jnp.int32)   # placeholder (see TODO above)

    spixel_h = jnp.array([num_sph], jnp.int32)
    spixel_w = jnp.array([num_spw], jnp.int32)

    net = StereoSpixelNetPallas(num_iter=2, is_training=True, stereo=True)
    out = net.forward(l, r, left_img, right_img, p2sp_index, invisible,
                      init_index, cir_index, problabel, spixel_h, spixel_w,
                      device=None)
    out = jax.block_until_ready(out)

    recon_feat2, recon_label, new_spix_indices = out[0], out[1], out[2]
    (M_rl, M_lr), (M_lrl, M_rlr), (V_lr, V_rl) = out[3], out[4], out[5]
    assert recon_feat2.shape == (B, 5, H, W)
    assert recon_label.shape == (B, n_classes, H, W)
    assert new_spix_indices.shape == (B, H, W)
    assert M_rl.shape == (B, H, W, W) and M_lrl.shape == (B, H, W, W)
    assert V_lr.shape == (B, 1, H, W) and V_rl.shape == (B, 1, H, W)
    print("KERNEL_OK")
</pallas_src>

<mosaic_0001>
module attributes {stable_mosaic.version = 11 : i64} {
  func.func @_mm_bias_kernel(%arg0: i32, %arg1: memref<256x64xf32, #tpu.memory_space<vmem>>, %arg2: memref<64x64xf32, #tpu.memory_space<vmem>>, %arg3: memref<1x64xf32, #tpu.memory_space<vmem>>, %arg4: memref<256x64xbf16, #tpu.memory_space<vmem>>) attributes {dimension_semantics = [#tpu.dimension_semantics<parallel>], iteration_bounds = array<i64: 2>, scalar_prefetch = 0 : i64, scratch_operands = 0 : i64, tpu.core_type = #tpu.core_type<tc>, window_params = [{transform_indices = @transform_0, window_bounds = array<i64: 256, 64>}, {pipeline_mode = #tpu.pipeline_mode<synchronous>, transform_indices = @transform_1, window_bounds = array<i64: 64, 64>}, {pipeline_mode = #tpu.pipeline_mode<synchronous>, transform_indices = @transform_2, window_bounds = array<i64: 1, 64>}, {transform_indices = @transform_3, window_bounds = array<i64: 256, 64>}]} {
    %c0 = arith.constant 0 : index
    %c0_0 = arith.constant 0 : index
    %0 = vector.load %arg1[%c0, %c0_0] : memref<256x64xf32, #tpu.memory_space<vmem>>, vector<256x64xf32>
    %1 = arith.truncf %0 : vector<256x64xf32> to vector<256x64xbf16>
    %c0_1 = arith.constant 0 : index
    %c0_2 = arith.constant 0 : index
    %2 = vector.load %arg2[%c0_1, %c0_2] : memref<64x64xf32, #tpu.memory_space<vmem>>, vector<64x64xf32>
    %3 = arith.truncf %2 : vector<64x64xf32> to vector<64x64xbf16>
    %cst = arith.constant dense<0.000000e+00> : vector<256x64xf32>
    %4 = tpu.matmul %1, %3, %cst {dimension_numbers = #tpu.dot_dimension_numbers<[1], [0], [0], [1], [0, 0, 1, 1], [], []>} : vector<256x64xbf16>, vector<64x64xbf16>, vector<256x64xf32> -> vector<256x64xf32>
    %c0_3 = arith.constant 0 : index
    %c0_4 = arith.constant 0 : index
    %5 = vector.load %arg3[%c0_3, %c0_4] : memref<1x64xf32, #tpu.memory_space<vmem>>, vector<1x64xf32>
    %6 = vector.broadcast %5 : vector<1x64xf32> to vector<256x64xf32>
    %7 = arith.addf %4, %6 : vector<256x64xf32>
    %8 = arith.truncf %7 : vector<256x64xf32> to vector<256x64xbf16>
    %c0_5 = arith.constant 0 : index
    %c0_6 = arith.constant 0 : index
    %9 = vector.load %arg4[%c0_5, %c0_6] : memref<256x64xbf16, #tpu.memory_space<vmem>>, vector<256x64xbf16>
    tpu.vector_store %arg4[%c0_5, %c0_6], %8 {strides = array<i32>} : memref<256x64xbf16, #tpu.memory_space<vmem>>, vector<256x64xbf16>,
    return
  }
  func.func @transform_0(%arg0: i32) -> (i32, i32) {
    %c0_i32 = arith.constant 0 : i32
    %c0_i32_0 = arith.constant 0 : i32
    return %arg0, %c0_i32 : i32, i32
  }
  func.func @transform_1(%arg0: i32) -> (i32, i32) {
    %c0_i32 = arith.constant 0 : i32
    %c0_i32_0 = arith.constant 0 : i32
    %c0_i32_1 = arith.constant 0 : i32
    return %c0_i32, %c0_i32_0 : i32, i32
  }
  func.func @transform_2(%arg0: i32) -> (i32, i32) {
    %c0_i32 = arith.constant 0 : i32
    %c0_i32_0 = arith.constant 0 : i32
    %c0_i32_1 = arith.constant 0 : i32
    return %c0_i32, %c0_i32_0 : i32, i32
  }
  func.func @transform_3(%arg0: i32) -> (i32, i32) {
    %c0_i32 = arith.constant 0 : i32
    %c0_i32_0 = arith.constant 0 : i32
    return %arg0, %c0_i32 : i32, i32
  }
}

</mosaic_0001>

<llo_original>
// kernel: tpu_custom_call.1
$region0: #{tpu_custom_call.1}
  #allocation0 [shape = 'u32[]', space=smem, size = 0x4, offset = 0x4, fixed_abs, tag = 'smem constant byte address 0x4 - core index']
  #allocation1 [shape = 'u32[144,128]{1,0:T(1,128)}', space=vmem, size = 0x12000, scoped, tag = 'internal scratch']
  %s0 = inlined_call_operand.vmem [shape: f32[512,64], index: 0, kind: input, shape index: {}]
  %s1 = inlined_call_operand.vmem [shape: f32[64,64], index: 1, kind: input, shape index: {}]
  %s2 = inlined_call_operand.vmem [shape: f32[1,64], index: 2, kind: input, shape index: {}]
  %s3 = inlined_call_operand.vmem [shape: bf16[512,64], index: 3, kind: output, shape index: {}]
  %s4 = sld [smem:[#allocation0]]
  $region45: #{tpu_custom_call.1} parent=0
    _
  %s6 = ssub.s32 1, %s4
  %s7 = scalar_select 0, %s6, %s4
  loop: start=0, step=1, limit=4
  $region2: #{tpu_custom_call.1} parent=0 // loop_pre_header
    _
  $region3: #{tpu_custom_call.1} parent=0 // loop_header
    %s9 = sphi 0, %s13
    %p10 = scmp.ge.s32.totalorder %s9, 4
    %s19 = sphi 0, %s21
    %s22 = sphi 0, %s19
    %s23 = sphi 0, %s22
    %s39 = sphi 0, %s23
    %s43 = sphi 0, %s43
    %s45 = sphi 0, %s43
    %s46 = sphi 0, %s45
    %s60 = sphi 0, %s46
    %s64 = sphi 0, %s64
    %s66 = sphi 0, %s64
    %s67 = sphi 0, %s66
    %s81 = sphi 0, %s67
    %s87 = sphi 0, %s89
    %s90 = sphi 0, %s87
    %s91 = sphi 0, %s90
    %s107 = sphi 0, %s91
  $region4: #{tpu_custom_call.1} parent=0 // loop_header_branch
    %12 = sbr.rel (%p10) target = $region8
  $region5: #{tpu_custom_call.1} parent=0 // loop_body
    %s14 = ssub.s32 %s9, 1
    %s15 = ssub.s32 %s9, 2
    %s16 = sadd.s32 %s9, 1
    %s17 = ssub.s32 %s9, %s16
    %p18 = scmp.eq.s32.totalorder %s17, 0
    %s20 = sadd.s32 %s19, 1
    %s21 = scalar_select %p18, %s19, %s20
    %p24 = pneg %p18
    %p25 = scmp.eq.s32.totalorder %s9, 1
    %p26 = por %p24, %p25
    %p27 = scmp.ne.s32.totalorder %s19, %s22
    %p28 = scmp.eq.s32.totalorder %s9, 0
    %p29 = por %p27, %p28
    %p30 = scmp.ne.s32.totalorder %s19, %s22
    %p31 = scmp.eq.s32.totalorder %s14, 1
    %p32 = por %p30, %p31
    %p33 = scmp.ne.s32.totalorder %s22, %s23
    %p34 = scmp.eq.s32.totalorder %s14, 0
    %p35 = por %p33, %p34
    %p36 = scmp.ne.s32.totalorder %s22, %s23
    %p37 = scmp.eq.s32.totalorder %s15, 1
    %p38 = por %p36, %p37
    %p40 = scmp.ne.s32.totalorder %s23, %s39
    %p41 = scmp.eq.s32.totalorder %s15, 0
    %p42 = por %p40, %p41
    %s44 = sadd.s32 %s43, 1
    %p47 = scmp.eq.s32.totalorder %s9, 1
    %p48 = scmp.ne.s32.totalorder %s43, %s45
    %p49 = scmp.eq.s32.totalorder %s9, 0
    %p50 = por %p48, %p49
    %p51 = scmp.ne.s32.totalorder %s43, %s45
    %p52 = scmp.eq.s32.totalorder %s14, 1
    %p53 = por %p51, %p52
    %p54 = scmp.ne.s32.totalorder %s45, %s46
    %p55 = scmp.eq.s32.totalorder %s14, 0
    %p56 = por %p54, %p55
    %p57 = scmp.ne.s32.totalorder %s45, %s46
    %p58 = scmp.eq.s32.totalorder %s15, 1
    %p59 = por %p57, %p58
    %p61 = scmp.ne.s32.totalorder %s46, %s60
    %p62 = scmp.eq.s32.totalorder %s15, 0
    %p63 = por %p61, %p62
    %s65 = sadd.s32 %s64, 1
    %p68 = scmp.eq.s32.totalorder %s9, 1
    %p69 = scmp.ne.s32.totalorder %s64, %s66
    %p70 = scmp.eq.s32.totalorder %s9, 0
    %p71 = por %p69, %p70
    %p72 = scmp.ne.s32.totalorder %s64, %s66
    %p73 = scmp.eq.s32.totalorder %s14, 1
    %p74 = por %p72, %p73
    %p75 = scmp.ne.s32.totalorder %s66, %s67
    %p76 = scmp.eq.s32.totalorder %s14, 0
    %p77 = por %p75, %p76
    %p78 = scmp.ne.s32.totalorder %s66, %s67
    %p79 = scmp.eq.s32.totalorder %s15, 1
    %p80 = por %p78, %p79
    %p82 = scmp.ne.s32.totalorder %s67, %s81
    %p83 = scmp.eq.s32.totalorder %s15, 0
    %p84 = por %p82, %p83
    %s85 = ssub.s32 %s9, %s16
    %p86 = scmp.eq.s32.totalorder %s85, 0
    %s88 = sadd.s32 %s87, 1
    %s89 = scalar_select %p86, %s87, %s88
    %p92 = pneg %p86
    %p93 = scmp.eq.s32.totalorder %s9, 1
    %p94 = por %p92, %p93
    %p95 = scmp.ne.s32.totalorder %s87, %s90
    %p96 = scmp.eq.s32.totalorder %s9, 0
    %p97 = por %p95, %p96
    %p98 = scmp.ne.s32.totalorder %s87, %s90
    %p99 = scmp.eq.s32.totalorder %s14, 1
    %p100 = por %p98, %p99
    %p101 = scmp.ne.s32.totalorder %s90, %s91
    %p102 = scmp.eq.s32.totalorder %s14, 0
    %p103 = por %p101, %p102
    %p104 = scmp.ne.s32.totalorder %s90, %s91
    %p105 = scmp.eq.s32.totalorder %s15, 1
    %p106 = por %p104, %p105
    %p108 = scmp.ne.s32.totalorder %s91, %s107
    %p109 = scmp.eq.s32.totalorder %s15, 0
    %p110 = por %p108, %p109
    %p111 = scmp.le.s32.totalorder 1, %s9
    %p112 = scmp.lt.s32.totalorder %s9, 3
    %p113 = pnand %p111, %p112
    %p114 = pneg %p113
    // Predicated region
    $region9: #{tpu_custom_call.1} parent=5 // pred_check
      _
    $region10: #{tpu_custom_call.1} parent=5 // pred_check_branch
      %116 = sbr.rel (%p113) target = $region12
    $region11: #{tpu_custom_call.1} parent=5 // pred_region
      %s117 = ssub.s32 %s9, 1
      // Predicated region
      $region13: #{tpu_custom_call.1} parent=11 // pred_check
        %p118 = pneg %p56
      $region14: #{tpu_custom_call.1} parent=11 // pred_check_branch
        %120 = sbr.rel (%p118) target = $region16
      $region15: #{tpu_custom_call.1} parent=11 // pred_region
        _
      $region16: #{tpu_custom_call.1} parent=11 // pred_fallthru
        _
      // Predicated region
      $region17: #{tpu_custom_call.1} parent=11 // pred_check
        %p121 = pneg %p77
      $region18: #{tpu_custom_call.1} parent=11 // pred_check_branch
        %123 = sbr.rel (%p121) target = $region20
      $region19: #{tpu_custom_call.1} parent=11 // pred_region
        _
      $region20: #{tpu_custom_call.1} parent=11 // pred_fallthru
        _
    $region12: #{tpu_custom_call.1} parent=5 // pred_fallthru
      _
    %p124 = scmp.lt.s32.totalorder %s9, 2
    // Predicated region
    $region21: #{tpu_custom_call.1} parent=5 // pred_check
      %p125 = pneg %p124
    $region22: #{tpu_custom_call.1} parent=5 // pred_check_branch
      %127 = sbr.rel (%p125) target = $region24
    $region23: #{tpu_custom_call.1} parent=5 // pred_region
      // Predicated region
      $region25: #{tpu_custom_call.1} parent=23 // pred_check
        %p128 = pneg %p29
      $region26: #{tpu_custom_call.1} parent=23 // pred_check_branch
        %130 = sbr.rel (%p128) target = $region28
      $region27: #{tpu_custom_call.1} parent=23 // pred_region
        %s131 = smul.u32 32, %s9
        %p132 = scmp.lt.s32.totalorder %s131, 63
        %s133 = scalar_select %p132, %s131, 63
        %s134 = smul.addr %s133, 8
        %s135 = scalar_lea.vmem %s0, %s134
        %s136 = smul.u32 32, %s9
      $region28: #{tpu_custom_call.1} parent=23 // pred_fallthru
        _
    $region24: #{tpu_custom_call.1} parent=5 // pred_fallthru
      _
    %p137 = scmp.le.s32.totalorder 1, %s9
    %p138 = scmp.lt.s32.totalorder %s9, 3
    %p139 = pnand %p137, %p138
    %p140 = pneg %p139
    // Predicated region
    $region29: #{tpu_custom_call.1} parent=5 // pred_check
      _
    $region30: #{tpu_custom_call.1} parent=5 // pred_check_branch
      %142 = sbr.rel (%p139) target = $region32
    $region31: #{tpu_custom_call.1} parent=5 // pred_region
      %s143 = ssub.s32 %s9, 1
      %s144 = smul.u32 32, %s14
      %p145 = scmp.lt.s32.totalorder %s144, 63
      %s146 = scalar_select %p145, %s144, 63
      %s147 = smul.addr %s146, 8
      %s148 = scalar_lea.vmem %s0, %s147
      %p149 = pneg %p35
      %p150 = pneg %p32
      %p151 = pneg %p56
      %p152 = pneg %p53
      %p153 = pneg %p77
      %p154 = pneg %p74
      %p155 = pneg %p103
      %p156 = pneg %p100
      %s157 = smul.u32 32, %s14
      %p158 = scmp.lt.s32.totalorder %s157, 63
      %s159 = scalar_select %p158, %s157, 63
      %s160 = smul.addr %s159, 4
      %s161 = scalar_lea.vmem %s3, %s160
      %s162 = smul.u32 32, %s14
      %p163 = scmp.lt.s32.totalorder %s162, 63
      %s164 = scalar_select %p163, %s162, 63
      %s165 = smul.addr %s164, 8
      %s166 = scalar_lea.vmem %s0, %s165
      %s167 = smul.u32 32, %s14
      %s168 = smul.u32 32, %s14
      %p169 = scmp.lt.s32.totalorder %s168, 63
      %s170 = scalar_select %p169, %s168, 63
      %s171 = smul.addr %s170, 4
      %s172 = scalar_lea.vmem %s3, %s171
      %s173 = smul.u32 32, %s14
      %v175 = vld [vmem:[%s166] sm:$0xff]
      %v176 = vld [vmem:[%s166 + $0x8] sm:$0xff]
      %v177 = vld [vmem:[%s166 + $0x10] sm:$0xff]
      %v178 = vld [vmem:[%s166 + $0x18] sm:$0xff]
      %v179 = vld [vmem:[%s166 + $0x20] sm:$0xff]
      %v180 = vld [vmem:[%s166 + $0x28] sm:$0xff]
      %v181 = vld [vmem:[%s166 + $0x30] sm:$0xff]
      %v182 = vld [vmem:[%s166 + $0x38] sm:$0xff]
      %v183 = vld [vmem:[%s166 + $0x40] sm:$0xff]
      %v184 = vld [vmem:[%s166 + $0x48] sm:$0xff]
      %v185 = vld [vmem:[%s166 + $0x50] sm:$0xff]
      %v186 = vld [vmem:[%s166 + $0x58] sm:$0xff]
      %v187 = vld [vmem:[%s166 + $0x60] sm:$0xff]
      %v188 = vld [vmem:[%s166 + $0x68] sm:$0xff]
      %v189 = vld [vmem:[%s166 + $0x70] sm:$0xff]
      %v190 = vld [vmem:[%s166 + $0x78] sm:$0xff]
      %v191 = vld [vmem:[%s166 + $0x80] sm:$0xff]
      %v192 = vld [vmem:[%s166 + $0x88] sm:$0xff]
      %v193 = vld [vmem:[%s166 + $0x90] sm:$0xff]
      %v194 = vld [vmem:[%s166 + $0x98] sm:$0xff]
      %v195 = vld [vmem:[%s166 + $0xa0] sm:$0xff]
      %v196 = vld [vmem:[%s166 + $0xa8] sm:$0xff]
      %v197 = vld [vmem:[%s166 + $0xb0] sm:$0xff]
      %v198 = vld [vmem:[%s166 + $0xb8] sm:$0xff]
      %v199 = vld [vmem:[%s166 + $0xc0] sm:$0xff]
      %v200 = vld [vmem:[%s166 + $0xc8] sm:$0xff]
      %v201 = vld [vmem:[%s166 + $0xd0] sm:$0xff]
      %v202 = vld [vmem:[%s166 + $0xd8] sm:$0xff]
      %v203 = vld [vmem:[%s166 + $0xe0] sm:$0xff]
      %v204 = vld [vmem:[%s166 + $0xe8] sm:$0xff]
      %v205 = vld [vmem:[%s166 + $0xf0] sm:$0xff]
      %v206 = vld [vmem:[%s166 + $0xf8] sm:$0xff]
      %v207 = vpack.c.bf16 %v176, %v175
      %v208 = vpack.c.bf16 %v178, %v177
      %v209 = vpack.c.bf16 %v180, %v179
      %v210 = vpack.c.bf16 %v182, %v181
      %v211 = vpack.c.bf16 %v184, %v183
      %v212 = vpack.c.bf16 %v186, %v185
      %v213 = vpack.c.bf16 %v188, %v187
      %v214 = vpack.c.bf16 %v190, %v189
      %v215 = vpack.c.bf16 %v192, %v191
      %v216 = vpack.c.bf16 %v194, %v193
      %v217 = vpack.c.bf16 %v196, %v195
      %v218 = vpack.c.bf16 %v198, %v197
      %v219 = vpack.c.bf16 %v200, %v199
      %v220 = vpack.c.bf16 %v202, %v201
      %v221 = vpack.c.bf16 %v204, %v203
      %v222 = vpack.c.bf16 %v206, %v205
      %v223 = vld [vmem:[%s1] sm:$0xff]
      %v224 = vld [vmem:[%s1 + $0x8] sm:$0xff]
      %v225 = vld [vmem:[%s1 + $0x10] sm:$0xff]
      %v226 = vld [vmem:[%s1 + $0x18] sm:$0xff]
      %v227 = vld [vmem:[%s1 + $0x20] sm:$0xff]
      %v228 = vld [vmem:[%s1 + $0x28] sm:$0xff]
      %v229 = vld [vmem:[%s1 + $0x30] sm:$0xff]
      %v230 = vld [vmem:[%s1 + $0x38] sm:$0xff]
      %v231 = vpack.c.bf16 %v224, %v223
      %v232 = vpack.c.bf16 %v226, %v225
      %v233 = vpack.c.bf16 %v228, %v227
      %v234 = vpack.c.bf16 %v230, %v229
      %v235 = vld [vmem:[%s2] sm:$0x1]
      %v237 = vlaneseq
      %v238 = vshrl.u32 %v237, 7
      %v239 = vsub.s32 0, %v238
      %v240 = vrot.slane %v235, %v239
      %vm242 = vcmask 523264
      %v244 = vsel %vm242, %v207, 0
      %v247 = vsel %vm242, %v208, 0
      %v250 = vsel %vm242, %v209, 0
      %v253 = vsel %vm242, %v210, 0
      %v256 = vsel %vm242, %v211, 0
      %v259 = vsel %vm242, %v212, 0
      %v262 = vsel %vm242, %v213, 0
      %v265 = vsel %vm242, %v214, 0
      %v268 = vsel %vm242, %v215, 0
      %v271 = vsel %vm242, %v216, 0
      %v274 = vsel %vm242, %v217, 0
      %v277 = vsel %vm242, %v218, 0
      %v280 = vsel %vm242, %v219, 0
      %v283 = vsel %vm242, %v220, 0
      %v286 = vsel %vm242, %v221, 0
      %v289 = vsel %vm242, %v222, 0
      %291 = vmatprep.subr.bf16.mxu0 0
      %292 = vmatpush1.bf16.msra.mxu0 %v231
      %293 = vmatprep.subr.bf16.mxu0 0
      %294 = vmatpush1.bf16.msra.mxu0 %v232
      %295 = vmatprep.subr.bf16.mxu0 0
      %296 = vmatpush1.bf16.msra.mxu0 %v233
      %297 = vmatprep.subr.bf16.mxu0 0
      %298 = vmatpush1.bf16.msra.mxu0 %v234
      %299 = vmatprep.subr.bf16.mxu0 0
      %300 = vmatpush1.bf16.msra.mxu0 0
      %301 = vmatprep.subr.bf16.mxu0 0
      %302 = vmatpush1.bf16.msra.mxu0 0
      %303 = vmatprep.subr.bf16.mxu0 0
      %304 = vmatpush1.bf16.msra.mxu0 0
      %305 = vmatprep.subr.bf16.mxu0 0
      %306 = vmatpush1.bf16.msra.mxu0 0
      %307 = vmatprep.subr.bf16.mxu0 0
      %308 = vmatpush1.bf16.msra.mxu0 0
      %309 = vmatprep.subr.bf16.mxu0 0
      %310 = vmatpush1.bf16.msra.mxu0 0
      %311 = vmatprep.subr.bf16.mxu0 0
      %312 = vmatpush1.bf16.msra.mxu0 0
      %313 = vmatprep.subr.bf16.mxu0 0
      %314 = vmatpush1.bf16.msra.mxu0 0
      %315 = vmatprep.subr.bf16.mxu0 0
      %316 = vmatpush1.bf16.msra.mxu0 0
      %317 = vmatprep.subr.bf16.mxu0 0
      %318 = vmatpush1.bf16.msra.mxu0 0
      %319 = vmatprep.subr.bf16.mxu0 0
      %320 = vmatpush1.bf16.msra.mxu0 0
      %321 = vmatprep.subr.bf16.mxu0 0
      %322 = vmatpush1.bf16.msra.mxu0 0
      %323 = vmatprep.mubr.bf16.mxu0 0
      %324 = vmatmul.mubr.bf16.gmra.mrb[0].mxu0 %v244
      %v325 = vpop.f32.mrb[0].mxu0
      %v326 = vadd.f32 %v240, %v325
      %v327 = vpop.f32.mrb[0].mxu0
      %v328 = vpop.f32.mrb[0].mxu0
      %v329 = vadd.f32 %v240, %v328
      %v330 = vpop.f32.mrb[0].mxu0
      %331 = vmatprep.mubr.bf16.mxu0 0
      %332 = vmatmul.mubr.bf16.gmra.mrb[0].mxu0 %v247
      %v333 = vpop.f32.mrb[0].mxu0
      %v334 = vadd.f32 %v240, %v333
      %v335 = vpop.f32.mrb[0].mxu0
      %v336 = vpop.f32.mrb[0].mxu0
      %v337 = vadd.f32 %v240, %v336
      %v338 = vpop.f32.mrb[0].mxu0
      %339 = vmatprep.mubr.bf16.mxu0 0
      %340 = vmatmul.mubr.bf16.gmra.mrb[0].mxu0 %v250
      %v341 = vpop.f32.mrb[0].mxu0
      %v342 = vadd.f32 %v240, %v341
      %v343 = vpop.f32.mrb[0].mxu0
      %v344 = vpop.f32.mrb[0].mxu0
      %v345 = vadd.f32 %v240, %v344
      %v346 = vpop.f32.mrb[0].mxu0
      %347 = vmatprep.mubr.bf16.mxu0 0
      %348 = vmatmul.mubr.bf16.gmra.mrb[0].mxu0 %v253
      %v349 = vpop.f32.mrb[0].mxu0
      %v350 = vadd.f32 %v240, %v349
      %v351 = vpop.f32.mrb[0].mxu0
      %v352 = vpop.f32.mrb[0].mxu0
      %v353 = vadd.f32 %v240, %v352
      %v354 = vpop.f32.mrb[0].mxu0
      %355 = vmatprep.mubr.bf16.mxu0 0
      %356 = vmatmul.mubr.bf16.gmra.mrb[0].mxu0 %v256
      %v357 = vpop.f32.mrb[0].mxu0
      %v358 = vadd.f32 %v240, %v357
      %v359 = vpop.f32.mrb[0].mxu0
      %v360 = vpop.f32.mrb[0].mxu0
      %v361 = vadd.f32 %v240, %v360
      %v362 = vpop.f32.mrb[0].mxu0
      %363 = vmatprep.mubr.bf16.mxu0 0
      %364 = vmatmul.mubr.bf16.gmra.mrb[0].mxu0 %v259
      %v365 = vpop.f32.mrb[0].mxu0
      %v366 = vadd.f32 %v240, %v365
      %v367 = vpop.f32.mrb[0].mxu0
      %v368 = vpop.f32.mrb[0].mxu0
      %v369 = vadd.f32 %v240, %v368
      %v370 = vpop.f32.mrb[0].mxu0
      %371 = vmatprep.mubr.bf16.mxu0 0
      %372 = vmatmul.mubr.bf16.gmra.mrb[0].mxu0 %v262
      %v373 = vpop.f32.mrb[0].mxu0
      %v374 = vadd.f32 %v240, %v373
      %v375 = vpop.f32.mrb[0].mxu0
      %v376 = vpop.f32.mrb[0].mxu0
      %v377 = vadd.f32 %v240, %v376
      %v378 = vpop.f32.mrb[0].mxu0
      %379 = vmatprep.mubr.bf16.mxu0 0
      %380 = vmatmul.mubr.bf16.gmra.mrb[0].mxu0 %v265
      %v381 = vpop.f32.mrb[0].mxu0
      %v382 = vadd.f32 %v240, %v381
      %v383 = vpop.f32.mrb[0].mxu0
      %v384 = vpop.f32.mrb[0].mxu0
      %v385 = vadd.f32 %v240, %v384
      %v386 = vpop.f32.mrb[0].mxu0
      %387 = vmatprep.mubr.bf16.mxu0 0
      %388 = vmatmul.mubr.bf16.gmra.mrb[0].mxu0 %v268
      %v389 = vpop.f32.mrb[0].mxu0
      %v390 = vadd.f32 %v240, %v389
      %v391 = vpop.f32.mrb[0].mxu0
      %v392 = vpop.f32.mrb[0].mxu0
      %v393 = vadd.f32 %v240, %v392
      %v394 = vpop.f32.mrb[0].mxu0
      %395 = vmatprep.mubr.bf16.mxu0 0
      %396 = vmatmul.mubr.bf16.gmra.mrb[0].mxu0 %v271
      %v397 = vpop.f32.mrb[0].mxu0
      %v398 = vadd.f32 %v240, %v397
      %v399 = vpop.f32.mrb[0].mxu0
      %v400 = vpop.f32.mrb[0].mxu0
      %v401 = vadd.f32 %v240, %v400
      %v402 = vpop.f32.mrb[0].mxu0
      %403 = vmatprep.mubr.bf16.mxu0 0
      %404 = vmatmul.mubr.bf16.gmra.mrb[0].mxu0 %v274
      %v405 = vpop.f32.mrb[0].mxu0
      %v406 = vadd.f32 %v240, %v405
      %v407 = vpop.f32.mrb[0].mxu0
      %v408 = vpop.f32.mrb[0].mxu0
      %v409 = vadd.f32 %v240, %v408
      %v410 = vpop.f32.mrb[0].mxu0
      %411 = vmatprep.mubr.bf16.mxu0 0
      %412 = vmatmul.mubr.bf16.gmra.mrb[0].mxu0 %v277
      %v413 = vpop.f32.mrb[0].mxu0
      %v414 = vadd.f32 %v240, %v413
      %v415 = vpop.f32.mrb[0].mxu0
      %v416 = vpop.f32.mrb[0].mxu0
      %v417 = vadd.f32 %v240, %v416
      %v418 = vpop.f32.mrb[0].mxu0
      %419 = vmatprep.mubr.bf16.mxu0 0
      %420 = vmatmul.mubr.bf16.gmra.mrb[0].mxu0 %v280
      %v421 = vpop.f32.mrb[0].mxu0
      %v422 = vadd.f32 %v240, %v421
      %v423 = vpop.f32.mrb[0].mxu0
      %v424 = vpop.f32.mrb[0].mxu0
      %v425 = vadd.f32 %v240, %v424
      %v426 = vpop.f32.mrb[0].mxu0
      %427 = vmatprep.mubr.bf16.mxu0 0
      %428 = vmatmul.mubr.bf16.gmra.mrb[0].mxu0 %v283
      %v429 = vpop.f32.mrb[0].mxu0
      %v430 = vadd.f32 %v240, %v429
      %v431 = vpop.f32.mrb[0].mxu0
      %v432 = vpop.f32.mrb[0].mxu0
      %v433 = vadd.f32 %v240, %v432
      %v434 = vpop.f32.mrb[0].mxu0
      %435 = vmatprep.mubr.bf16.mxu0 0
      %436 = vmatmul.mubr.bf16.gmra.mrb[0].mxu0 %v286
      %v437 = vpop.f32.mrb[0].mxu0
      %v438 = vadd.f32 %v240, %v437
      %v439 = vpop.f32.mrb[0].mxu0
      %v440 = vpop.f32.mrb[0].mxu0
      %v441 = vadd.f32 %v240, %v440
      %v442 = vpop.f32.mrb[0].mxu0
      %443 = vmatprep.mubr.bf16.mxu0 0
      %444 = vmatmul.mubr.bf16.gmra.mrb[0].mxu0 %v289
      %v445 = vpop.f32.mrb[0].mxu0
      %v446 = vadd.f32 %v240, %v445
      %v447 = vpop.f32.mrb[0].mxu0
      %v448 = vpop.f32.mrb[0].mxu0
      %v449 = vadd.f32 %v240, %v448
      %v450 = vpop.f32.mrb[0].mxu0
      %451 = vdwg.mxu0
      %v452 = vpack.c.bf16 %v329, %v326
      %v453 = vpack.c.bf16 %v337, %v334
      %v454 = vpack.c.bf16 %v345, %v342
      %v455 = vpack.c.bf16 %v353, %v350
      %v456 = vpack.c.bf16 %v361, %v358
      %v457 = vpack.c.bf16 %v369, %v366
      %v458 = vpack.c.bf16 %v377, %v374
      %v459 = vpack.c.bf16 %v385, %v382
      %v460 = vpack.c.bf16 %v393, %v390
      %v461 = vpack.c.bf16 %v401, %v398
      %v462 = vpack.c.bf16 %v409, %v406
      %v463 = vpack.c.bf16 %v417, %v414
      %v464 = vpack.c.bf16 %v425, %v422
      %v465 = vpack.c.bf16 %v433, %v430
      %v466 = vpack.c.bf16 %v441, %v438
      %v467 = vpack.c.bf16 %v449, %v446
      %v484 = vunpack.c.l.b16 %v452
      %v485 = vunpack.c.h.b16 %v452
      %v486 = vunpack.c.l.b16 %v453
      %v487 = vunpack.c.h.b16 %v453
      %v488 = vunpack.c.l.b16 %v454
      %v489 = vunpack.c.h.b16 %v454
      %v490 = vunpack.c.l.b16 %v455
      %v491 = vunpack.c.h.b16 %v455
      %v492 = vunpack.c.l.b16 %v456
      %v493 = vunpack.c.h.b16 %v456
      %v494 = vunpack.c.l.b16 %v457
      %v495 = vunpack.c.h.b16 %v457
      %v496 = vunpack.c.l.b16 %v458
      %v497 = vunpack.c.h.b16 %v458
      %v498 = vunpack.c.l.b16 %v459
      %v499 = vunpack.c.h.b16 %v459
      %v500 = vunpack.c.l.b16 %v460
      %v501 = vunpack.c.h.b16 %v460
      %v502 = vunpack.c.l.b16 %v461
      %v503 = vunpack.c.h.b16 %v461
      %v504 = vunpack.c.l.b16 %v462
      %v505 = vunpack.c.h.b16 %v462
      %v506 = vunpack.c.l.b16 %v463
      %v507 = vunpack.c.h.b16 %v463
      %v508 = vunpack.c.l.b16 %v464
      %v509 = vunpack.c.h.b16 %v464
      %v510 = vunpack.c.l.b16 %v465
      %v511 = vunpack.c.h.b16 %v465
      %v512 = vunpack.c.l.b16 %v466
      %v513 = vunpack.c.h.b16 %v466
      %v514 = vunpack.c.l.b16 %v467
      %v515 = vunpack.c.h.b16 %v467
      %v516 = vpack.c.b16 %v484, %v484
      %v517 = vpack.c.b16 %v485, %v485
      %v518 = vpack.c.b16 %v486, %v486
      %v519 = vpack.c.b16 %v487, %v487
      %v520 = vpack.c.b16 %v488, %v488
      %v521 = vpack.c.b16 %v489, %v489
      %v522 = vpack.c.b16 %v490, %v490
      %v523 = vpack.c.b16 %v491, %v491
      %v524 = vpack.c.b16 %v492, %v492
      %v525 = vpack.c.b16 %v493, %v493
      %v526 = vpack.c.b16 %v494, %v494
      %v527 = vpack.c.b16 %v495, %v495
      %v528 = vpack.c.b16 %v496, %v496
      %v529 = vpack.c.b16 %v497, %v497
      %v530 = vpack.c.b16 %v498, %v498
      %v531 = vpack.c.b16 %v499, %v499
      %v532 = vpack.c.b16 %v500, %v500
      %v533 = vpack.c.b16 %v501, %v501
      %v534 = vpack.c.b16 %v502, %v502
      %v535 = vpack.c.b16 %v503, %v503
      %v536 = vpack.c.b16 %v504, %v504
      %v537 = vpack.c.b16 %v505, %v505
      %v538 = vpack.c.b16 %v506, %v506
      %v539 = vpack.c.b16 %v507, %v507
      %v540 = vpack.c.b16 %v508, %v508
      %v541 = vpack.c.b16 %v509, %v509
      %v542 = vpack.c.b16 %v510, %v510
      %v543 = vpack.c.b16 %v511, %v511
      %v544 = vpack.c.b16 %v512, %v512
      %v545 = vpack.c.b16 %v513, %v513
      %v546 = vpack.c.b16 %v514, %v514
      %v547 = vpack.c.b16 %v515, %v515
      %vm580 = vcmask 519168
      %581 = vst.msk [vmem:[%s172] sm:$0xf] %vm580, %v516
      %582 = vst.msk [vmem:[%s172 + $0x4] sm:$0xf] %vm580, %v517
      %583 = vst.msk [vmem:[%s172 + $0x8] sm:$0xf] %vm580, %v518
      %584 = vst.msk [vmem:[%s172 + $0xc] sm:$0xf] %vm580, %v519
      %585 = vst.msk [vmem:[%s172 + $0x10] sm:$0xf] %vm580, %v520
      %586 = vst.msk [vmem:[%s172 + $0x14] sm:$0xf] %vm580, %v521
      %587 = vst.msk [vmem:[%s172 + $0x18] sm:$0xf] %vm580, %v522
      %588 = vst.msk [vmem:[%s172 + $0x1c] sm:$0xf] %vm580, %v523
      %589 = vst.msk [vmem:[%s172 + $0x20] sm:$0xf] %vm580, %v524
      %590 = vst.msk [vmem:[%s172 + $0x24] sm:$0xf] %vm580, %v525
      %591 = vst.msk [vmem:[%s172 + $0x28] sm:$0xf] %vm580, %v526
      %592 = vst.msk [vmem:[%s172 + $0x2c] sm:$0xf] %vm580, %v527
      %593 = vst.msk [vmem:[%s172 + $0x30] sm:$0xf] %vm580, %v528
      %594 = vst.msk [vmem:[%s172 + $0x34] sm:$0xf] %vm580, %v529
      %595 = vst.msk [vmem:[%s172 + $0x38] sm:$0xf] %vm580, %v530
      %596 = vst.msk [vmem:[%s172 + $0x3c] sm:$0xf] %vm580, %v531
      %597 = vst.msk [vmem:[%s172 + $0x40] sm:$0xf] %vm580, %v532
      %598 = vst.msk [vmem:[%s172 + $0x44] sm:$0xf] %vm580, %v533
      %599 = vst.msk [vmem:[%s172 + $0x48] sm:$0xf] %vm580, %v534
      %600 = vst.msk [vmem:[%s172 + $0x4c] sm:$0xf] %vm580, %v535
      %601 = vst.msk [vmem:[%s172 + $0x50] sm:$0xf] %vm580, %v536
      %602 = vst.msk [vmem:[%s172 + $0x54] sm:$0xf] %vm580, %v537
      %603 = vst.msk [vmem:[%s172 + $0x58] sm:$0xf] %vm580, %v538
      %604 = vst.msk [vmem:[%s172 + $0x5c] sm:$0xf] %vm580, %v539
      %605 = vst.msk [vmem:[%s172 + $0x60] sm:$0xf] %vm580, %v540
      %606 = vst.msk [vmem:[%s172 + $0x64] sm:$0xf] %vm580, %v541
      %607 = vst.msk [vmem:[%s172 + $0x68] sm:$0xf] %vm580, %v542
      %608 = vst.msk [vmem:[%s172 + $0x6c] sm:$0xf] %vm580, %v543
      %609 = vst.msk [vmem:[%s172 + $0x70] sm:$0xf] %vm580, %v544
      %610 = vst.msk [vmem:[%s172 + $0x74] sm:$0xf] %vm580, %v545
      %611 = vst.msk [vmem:[%s172 + $0x78] sm:$0xf] %vm580, %v546
      %612 = vst.msk [vmem:[%s172 + $0x7c] sm:$0xf] %vm580, %v547
      %s613 = smul.u32 32, %s14
      %p614 = scmp.lt.s32.totalorder %s613, 63
      %s615 = scalar_select %p614, %s613, 63
      %s616 = smul.addr %s615, 4
      %s617 = scalar_lea.vmem %s3, %s616
      // Predicated region
      $region33: #{tpu_custom_call.1} parent=31 // pred_check
        %p618 = pneg %p100
      $region34: #{tpu_custom_call.1} parent=31 // pred_check_branch
        %620 = sbr.rel (%p618) target = $region36
      $region35: #{tpu_custom_call.1} parent=31 // pred_region
        %s621 = smul.u32 32, %s14
      $region36: #{tpu_custom_call.1} parent=31 // pred_fallthru
        _
    $region32: #{tpu_custom_call.1} parent=5 // pred_fallthru
      _
    %p622 = scmp.le.s32.totalorder 2, %s9
    // Predicated region
    $region37: #{tpu_custom_call.1} parent=5 // pred_check
      %p623 = pneg %p622
    $region38: #{tpu_custom_call.1} parent=5 // pred_check_branch
      %625 = sbr.rel (%p623) target = $region40
    $region39: #{tpu_custom_call.1} parent=5 // pred_region
      %s626 = ssub.s32 %s9, 2
      // Predicated region
      $region41: #{tpu_custom_call.1} parent=39 // pred_check
        %p627 = pneg %p106
      $region42: #{tpu_custom_call.1} parent=39 // pred_check_branch
        %629 = sbr.rel (%p627) target = $region44
      $region43: #{tpu_custom_call.1} parent=39 // pred_region
        %s630 = smul.u32 32, %s15
        %p631 = scmp.lt.s32.totalorder %s630, 63
        %s632 = scalar_select %p631, %s630, 63
        %s633 = smul.addr %s632, 4
        %s634 = scalar_lea.vmem %s3, %s633
      $region44: #{tpu_custom_call.1} parent=39 // pred_fallthru
        _
    $region40: #{tpu_custom_call.1} parent=5 // pred_fallthru
      _
  $region6: #{tpu_custom_call.1} parent=0 // loop_footer
    %s13 = sadd.s32 1, %s9
  $region7: #{tpu_custom_call.1} parent=0 // loop_footer_branch
    %8 = sbr.rel target = $region3
  $region8: #{tpu_custom_call.1} parent=0 // loop_exit
    _

</llo_original>
